<compile_context>
chip_gen: v7x
topology: tpu7x:2x2x1
jax: 0.10.0
libtpu: 0.0.40
codegen_flags: <defaults>
</compile_context>

<pallas_src>
import jax
import jax.numpy as jnp
import numpy as np
from jax.experimental import pallas as pl
from jax.experimental.pallas import tpu as pltpu

BCE_POS_WEIGHT = 20.0

_OUT_SUB, _OUT_LANE = 8, 128          # lane-dense per-chunk partial-output tile


def _tacotron2_loss_kernel(olens_ref,                        # SMEM (B,) int32
                           after_ref, before_ref, ys_ref,    # VMEM (Bt, L, D)
                           logits_ref, labels_ref,           # VMEM (1, Bt, L)
                           l1_ref, mse_ref, bce_ref):        # VMEM (1, 8, 128)
    g = pl.program_id(0)
    Bt, L, D = after_ref.shape

    # Time-index iotas shared by every item of the chunk.
    t_feat = jax.lax.broadcasted_iota(jnp.int32, (L, D), 0)   # (L, D)
    t_tok = jax.lax.broadcasted_iota(jnp.int32, (1, L), 1)    # (1, L)

    # Stop-token tensors are tiny; load the whole chunk once (lane-dense).
    x_all = logits_ref[0].astype(jnp.float32)                 # (Bt, L)
    z_all = labels_ref[0].astype(jnp.float32)                 # (Bt, L)

    l1_acc = jnp.float32(0.0)
    mse_acc = jnp.float32(0.0)
    bce_acc = jnp.float32(0.0)

    # Static unroll over the (<= 8) items in this chunk.
    for i in range(Bt):
        olen = olens_ref[g * Bt + i]                          # int32 scalar
        olen_f = olen.astype(jnp.float32)
        inv_olen = jnp.where(olen > 0, 1.0 / olen_f, 0.0)     # 0-len -> 0 contrib

        a_i = after_ref[i].astype(jnp.float32)                # (L, D)
        b_i = before_ref[i].astype(jnp.float32)               # (L, D)
        y_i = ys_ref[i].astype(jnp.float32)                   # (L, D)

        mask2d = t_feat < olen                                # (L, D) bool
        da = a_i - y_i
        db = b_i - y_i
        l1_acc += jnp.sum(
            jnp.where(mask2d, jnp.abs(da) + jnp.abs(db), 0.0)) * inv_olen
        mse_acc += jnp.sum(
            jnp.where(mask2d, da * da + db * db, 0.0)) * inv_olen

        x_i = x_all[i:i + 1, :]                               # (1, L)
        z_i = z_all[i:i + 1, :]
        mask1d = t_tok < olen                                 # (1, L) bool
        # BCEWithLogits(pos_weight=pw), numerically stable softplus(-x):
        #   loss = (1 - z) * x + (1 + (pw - 1) * z) * softplus(-x)
        sp = jnp.maximum(-x_i, 0.0) + jnp.log1p(jnp.exp(-jnp.abs(x_i)))
        bce_elem = (1.0 - z_i) * x_i + (1.0 + (BCE_POS_WEIGHT - 1.0) * z_i) * sp
        bce_acc += jnp.sum(jnp.where(mask1d, bce_elem, 0.0)) * inv_olen

    # Lane-dense splat stores; only [0, 0] is read back outside.
    l1_ref[0] = jnp.full((_OUT_SUB, _OUT_LANE), l1_acc, jnp.float32)
    mse_ref[0] = jnp.full((_OUT_SUB, _OUT_LANE), mse_acc, jnp.float32)
    bce_ref[0] = jnp.full((_OUT_SUB, _OUT_LANE), bce_acc, jnp.float32)


def tacotron2_loss(after_outs, before_outs, logits, ys, labels, olens,
                   *, vmem_budget_bytes=20 * 1024 * 1024):
    """Weighted-masking Tacotron2 loss.

    Returns (l1_loss, mse_loss, bce_loss) float32 scalars. Inputs are streamed
    in their native dtype (e.g. bf16) and upcast inside the kernel.
    """
    B, L, D = ys.shape
    assert after_outs.shape == (B, L, D) and before_outs.shape == (B, L, D)
    assert logits.shape == (B, L) and labels.shape == (B, L)

    # Pick the batch-chunk size: as large as possible (<= 8) while keeping the
    # auto-pipeline's double-buffered inputs under the VMEM budget, and
    # dividing B exactly (no padding copies of HBM-resident tensors).
    per_item_vmem = 2 * (
        L * D * (after_outs.dtype.itemsize + before_outs.dtype.itemsize
                 + ys.dtype.itemsize)
        + L * (logits.dtype.itemsize + labels.dtype.itemsize))
    cap = int(max(1, min(8, B, vmem_budget_bytes // max(per_item_vmem, 1))))
    block_b = 1
    for bb in range(cap, 0, -1):
        if B % bb == 0:
            block_b = bb
            break
    G = B // block_b

    # Lane-dense (G, Bt, L) view of the stop-token tensors (zero-copy reshape).
    logits_g = logits.reshape(G, block_b, L)
    labels_g = labels.reshape(G, block_b, L)

    out_shape = jax.ShapeDtypeStruct((G, _OUT_SUB, _OUT_LANE), jnp.float32)
    feat_spec = pl.BlockSpec((block_b, L, D), lambda g, olens: (g, 0, 0))
    tok_spec = pl.BlockSpec((1, block_b, L), lambda g, olens: (g, 0, 0))
    out_spec = pl.BlockSpec((1, _OUT_SUB, _OUT_LANE), lambda g, olens: (g, 0, 0))

    l1_p, mse_p, bce_p = pl.pallas_call(
        _tacotron2_loss_kernel,
        out_shape=(out_shape, out_shape, out_shape),
        grid_spec=pltpu.PrefetchScalarGridSpec(
            num_scalar_prefetch=1,
            grid=(G,),
            in_specs=[feat_spec, feat_spec, feat_spec, tok_spec, tok_spec],
            out_specs=[out_spec, out_spec, out_spec],
        ),
        compiler_params=pltpu.CompilerParams(
            dimension_semantics=("parallel",),        # independent chunks
            vmem_limit_bytes=32 * 1024 * 1024,        # safe on v5e/v6e/v7x
        ),
    )(olens.astype(jnp.int32),
      after_outs, before_outs, ys, logits_g, labels_g)

    # Tiny final reduction / global scaling (1/(B*D) for features, 1/B for BCE).
    l1 = jnp.sum(l1_p[:, 0, 0]) / jnp.float32(B * D)
    mse = jnp.sum(mse_p[:, 0, 0]) / jnp.float32(B * D)
    bce = jnp.sum(bce_p[:, 0, 0]) / jnp.float32(B)
    return l1, mse, bce


def _reference_loss(after_outs, before_outs, logits, ys, labels, olens):
    """Pure-JAX reference mirroring the PyTorch weighted-masking path."""
    B, L, D = ys.shape
    t = jnp.arange(L)[None, :]                                     # (1, L)
    masks = (t < olens[:, None]).astype(jnp.float32)[..., None]    # (B, L, 1)
    weights = masks / jnp.sum(masks, axis=1, keepdims=True)
    out_w = weights / (B * D)
    logit_w = weights[..., 0] / B

    l1 = jnp.abs(after_outs - ys) + jnp.abs(before_outs - ys)
    mse = (after_outs - ys) ** 2 + (before_outs - ys) ** 2
    x, z, pw = logits, labels, BCE_POS_WEIGHT
    sp = jnp.maximum(-x, 0.0) + jnp.log1p(jnp.exp(-jnp.abs(x)))
    bce = (1.0 - z) * x + (1.0 + (pw - 1.0) * z) * sp

    l1_loss = jnp.sum(l1 * out_w * masks)
    mse_loss = jnp.sum(mse * out_w * masks)
    bce_loss = jnp.sum(bce * logit_w * masks[..., 0])
    return l1_loss, mse_loss, bce_loss


if __name__ == "__main__":
    key = jax.random.PRNGKey(0)
    B, L, D = 2, 16, 32
    k1, k2, k3, k4 = jax.random.split(key, 4)

    after_outs = jax.random.normal(k1, (B, L, D), dtype=jnp.float32)
    before_outs = jax.random.normal(k2, (B, L, D), dtype=jnp.float32)
    ys = jax.random.normal(k3, (B, L, D), dtype=jnp.float32)
    logits = jax.random.normal(k4, (B, L), dtype=jnp.float32)

    olens = jnp.array([16, 11], dtype=jnp.int32)
    # stop-token labels: 1 at the last valid frame, 0 elsewhere
    labels = (jnp.arange(L)[None, :] == (olens[:, None] - 1)).astype(jnp.float32)

    # float32 path
    l1, mse, bce = jax.block_until_ready(
        tacotron2_loss(after_outs, before_outs, logits, ys, labels, olens))
    rl1, rmse, rbce = _reference_loss(after_outs, before_outs, logits, ys,
                                      labels, olens)
    np.testing.assert_allclose(np.asarray(l1), np.asarray(rl1), rtol=1e-5, atol=1e-5)
    np.testing.assert_allclose(np.asarray(mse), np.asarray(rmse), rtol=1e-5, atol=1e-5)
    np.testing.assert_allclose(np.asarray(bce), np.asarray(rbce), rtol=1e-5, atol=1e-5)

    # bf16 streaming path (inputs stay bf16 on the wire; upcast inside kernel)
    a16 = after_outs.astype(jnp.bfloat16)
    b16 = before_outs.astype(jnp.bfloat16)
    y16 = ys.astype(jnp.bfloat16)
    x16 = logits.astype(jnp.bfloat16)
    l1b, mseb, bceb = jax.block_until_ready(
        tacotron2_loss(a16, b16, x16, y16, labels, olens))
    rl1b, rmseb, rbceb = _reference_loss(
        a16.astype(jnp.float32), b16.astype(jnp.float32),
        x16.astype(jnp.float32), y16.astype(jnp.float32), labels, olens)
    np.testing.assert_allclose(np.asarray(l1b), np.asarray(rl1b), rtol=1e-3, atol=1e-3)
    np.testing.assert_allclose(np.asarray(mseb), np.asarray(rmseb), rtol=1e-3, atol=1e-3)
    np.testing.assert_allclose(np.asarray(bceb), np.asarray(rbceb), rtol=1e-3, atol=1e-3)

    print("KERNEL_OK")
</pallas_src>

<mosaic_0001>
module attributes {stable_mosaic.version = 11 : i64} {
  func.func @_tacotron2_loss_kernel(%arg0: i32, %arg1: memref<2xi32, #tpu.memory_space<smem>>, %arg2: memref<2x16x32xf32, #tpu.memory_space<vmem>>, %arg3: memref<2x16x32xf32, #tpu.memory_space<vmem>>, %arg4: memref<2x16x32xf32, #tpu.memory_space<vmem>>, %arg5: memref<1x2x16xf32, #tpu.memory_space<vmem>>, %arg6: memref<1x2x16xf32, #tpu.memory_space<vmem>>, %arg7: memref<1x8x128xf32, #tpu.memory_space<vmem>>, %arg8: memref<1x8x128xf32, #tpu.memory_space<vmem>>, %arg9: memref<1x8x128xf32, #tpu.memory_space<vmem>>) attributes {dimension_semantics = [#tpu.dimension_semantics<parallel>], iteration_bounds = array<i64: 1>, scalar_prefetch = 1 : i64, scratch_operands = 0 : i64, tpu.core_type = #tpu.core_type<tc>, window_params = [{transform_indices = @transform_0, window_bounds = array<i64: 2, 16, 32>}, {transform_indices = @transform_1, window_bounds = array<i64: 2, 16, 32>}, {transform_indices = @transform_2, window_bounds = array<i64: 2, 16, 32>}, {transform_indices = @transform_3, window_bounds = array<i64: 1, 2, 16>}, {transform_indices = @transform_4, window_bounds = array<i64: 1, 2, 16>}, {transform_indices = @transform_5, window_bounds = array<i64: 1, 8, 128>}, {transform_indices = @transform_6, window_bounds = array<i64: 1, 8, 128>}, {transform_indices = @transform_7, window_bounds = array<i64: 1, 8, 128>}]} {
    %0 = tpu.iota {dimensions = array<i32: 0>} : vector<16x32xi32>
    %1 = tpu.iota {dimensions = array<i32: 1>} : vector<1x16xi32>
    %c0 = arith.constant 0 : index
    %c0_0 = arith.constant 0 : index
    %c0_1 = arith.constant 0 : index
    %2 = vector.load %arg5[%c0, %c0_0, %c0_1] : memref<1x2x16xf32, #tpu.memory_space<vmem>>, vector<1x2x16xf32>
    %3 = vector.shape_cast %2 : vector<1x2x16xf32> to vector<2x16xf32>
    %c0_2 = arith.constant 0 : index
    %c0_3 = arith.constant 0 : index
    %c0_4 = arith.constant 0 : index
    %4 = vector.load %arg6[%c0_2, %c0_3, %c0_4] : memref<1x2x16xf32, #tpu.memory_space<vmem>>, vector<1x2x16xf32>
    %5 = vector.shape_cast %4 : vector<1x2x16xf32> to vector<2x16xf32>
    %c2_i32 = arith.constant 2 : i32
    %6 = arith.muli %arg0, %c2_i32 : i32
    %c0_i32 = arith.constant 0 : i32
    %7 = arith.addi %6, %c0_i32 : i32
    %8 = arith.index_cast %7 : i32 to index
    %9 = memref.load %arg1[%8] : memref<2xi32, #tpu.memory_space<smem>>
    %10 = arith.sitofp %9 : i32 to f32
    %c0_i32_5 = arith.constant 0 : i32
    %11 = arith.cmpi sgt, %9, %c0_i32_5 : i32
    %cst = arith.constant 1.000000e+00 : f32
    %12 = arith.divf %cst, %10 : f32
    %cst_6 = arith.constant 0.000000e+00 : f32
    %13 = arith.select %11, %12, %cst_6 : f32
    %c0_7 = arith.constant 0 : index
    %c0_8 = arith.constant 0 : index
    %c0_9 = arith.constant 0 : index
    %14 = vector.load %arg2[%c0_7, %c0_8, %c0_9] : memref<2x16x32xf32, #tpu.memory_space<vmem>>, vector<1x16x32xf32>
    %15 = vector.shape_cast %14 : vector<1x16x32xf32> to vector<16x32xf32>
    %c0_10 = arith.constant 0 : index
    %c0_11 = arith.constant 0 : index
    %c0_12 = arith.constant 0 : index
    %16 = vector.load %arg3[%c0_10, %c0_11, %c0_12] : memref<2x16x32xf32, #tpu.memory_space<vmem>>, vector<1x16x32xf32>
    %17 = vector.shape_cast %16 : vector<1x16x32xf32> to vector<16x32xf32>
    %c0_13 = arith.constant 0 : index
    %c0_14 = arith.constant 0 : index
    %c0_15 = arith.constant 0 : index
    %18 = vector.load %arg4[%c0_13, %c0_14, %c0_15] : memref<2x16x32xf32, #tpu.memory_space<vmem>>, vector<1x16x32xf32>
    %19 = vector.shape_cast %18 : vector<1x16x32xf32> to vector<16x32xf32>
    %20 = vector.broadcast %9 : i32 to vector<16x32xi32>
    %21 = arith.cmpi slt, %0, %20 : vector<16x32xi32>
    %22 = arith.subf %15, %19 : vector<16x32xf32>
    %23 = arith.subf %17, %19 : vector<16x32xf32>
    %24 = math.absf %22 : vector<16x32xf32>
    %25 = math.absf %23 : vector<16x32xf32>
    %26 = arith.addf %24, %25 : vector<16x32xf32>
    %cst_16 = arith.constant 0.000000e+00 : f32
    %27 = vector.broadcast %cst_16 : f32 to vector<16x32xf32>
    %28 = arith.select %21, %26, %27 : vector<16x32xi1>, vector<16x32xf32>
    %29 = vector.shape_cast %28 : vector<16x32xf32> to vector<1x16x32xf32>
    %cst_17 = arith.constant dense<0.000000e+00> : vector<1xf32>
    %30 = vector.multi_reduction <add>, %29, %cst_17 [1, 2] : vector<1x16x32xf32> to vector<1xf32>
    %31 = vector.shape_cast %30 : vector<1xf32> to vector<1x1x1xf32>
    %32 = vector.extract %31[0, 0, 0] : f32 from vector<1x1x1xf32>
    %33 = arith.mulf %32, %13 : f32
    %cst_18 = arith.constant 0.000000e+00 : f32
    %34 = arith.addf %cst_18, %33 : f32
    %35 = arith.mulf %22, %22 : vector<16x32xf32>
    %36 = arith.mulf %23, %23 : vector<16x32xf32>
    %37 = arith.addf %35, %36 : vector<16x32xf32>
    %cst_19 = arith.constant 0.000000e+00 : f32
    %38 = vector.broadcast %cst_19 : f32 to vector<16x32xf32>
    %39 = arith.select %21, %37, %38 : vector<16x32xi1>, vector<16x32xf32>
    %40 = vector.shape_cast %39 : vector<16x32xf32> to vector<1x16x32xf32>
    %cst_20 = arith.constant dense<0.000000e+00> : vector<1xf32>
    %41 = vector.multi_reduction <add>, %40, %cst_20 [1, 2] : vector<1x16x32xf32> to vector<1xf32>
    %42 = vector.shape_cast %41 : vector<1xf32> to vector<1x1x1xf32>
    %43 = vector.extract %42[0, 0, 0] : f32 from vector<1x1x1xf32>
    %44 = arith.mulf %43, %13 : f32
    %cst_21 = arith.constant 0.000000e+00 : f32
    %45 = arith.addf %cst_21, %44 : f32
    %46 = vector.extract_strided_slice %3 {offsets = [0, 0], sizes = [1, 16], strides = [1, 1]} : vector<2x16xf32> to vector<1x16xf32>
    %47 = vector.extract_strided_slice %5 {offsets = [0, 0], sizes = [1, 16], strides = [1, 1]} : vector<2x16xf32> to vector<1x16xf32>
    %48 = vector.broadcast %9 : i32 to vector<1x16xi32>
    %49 = arith.cmpi slt, %1, %48 : vector<1x16xi32>
    %cst_22 = arith.constant 0.000000e+00 : f32
    %50 = vector.broadcast %cst_22 : f32 to vector<1x16xf32>
    %51 = arith.subf %50, %46 : vector<1x16xf32>
    %cst_23 = arith.constant 0.000000e+00 : f32
    %52 = vector.broadcast %cst_23 : f32 to vector<1x16xf32>
    %53 = arith.maximumf %51, %52 : vector<1x16xf32>
    %54 = math.absf %46 : vector<1x16xf32>
    %cst_24 = arith.constant 0.000000e+00 : f32
    %55 = vector.broadcast %cst_24 : f32 to vector<1x16xf32>
    %56 = arith.subf %55, %54 : vector<1x16xf32>
    %57 = math.exp %56 : vector<1x16xf32>
    %58 = math.log1p %57 : vector<1x16xf32>
    %59 = arith.addf %53, %58 : vector<1x16xf32>
    %cst_25 = arith.constant 1.000000e+00 : f32
    %60 = vector.broadcast %cst_25 : f32 to vector<1x16xf32>
    %61 = arith.subf %60, %47 : vector<1x16xf32>
    %62 = arith.mulf %61, %46 : vector<1x16xf32>
    %cst_26 = arith.constant 1.900000e+01 : f32
    %63 = vector.broadcast %cst_26 : f32 to vector<1x16xf32>
    %64 = arith.mulf %63, %47 : vector<1x16xf32>
    %cst_27 = arith.constant 1.000000e+00 : f32
    %65 = vector.broadcast %cst_27 : f32 to vector<1x16xf32>
    %66 = arith.addf %65, %64 : vector<1x16xf32>
    %67 = arith.mulf %66, %59 : vector<1x16xf32>
    %68 = arith.addf %62, %67 : vector<1x16xf32>
    %cst_28 = arith.constant 0.000000e+00 : f32
    %69 = vector.broadcast %cst_28 : f32 to vector<1x16xf32>
    %70 = arith.select %49, %68, %69 : vector<1x16xi1>, vector<1x16xf32>
    %71 = vector.shape_cast %70 : vector<1x16xf32> to vector<1x1x16xf32>
    %cst_29 = arith.constant dense<0.000000e+00> : vector<1xf32>
    %72 = vector.multi_reduction <add>, %71, %cst_29 [1, 2] : vector<1x1x16xf32> to vector<1xf32>
    %73 = vector.shape_cast %72 : vector<1xf32> to vector<1x1x1xf32>
    %74 = vector.extract %73[0, 0, 0] : f32 from vector<1x1x1xf32>
    %75 = arith.mulf %74, %13 : f32
    %cst_30 = arith.constant 0.000000e+00 : f32
    %76 = arith.addf %cst_30, %75 : f32
    %c2_i32_31 = arith.constant 2 : i32
    %77 = arith.muli %arg0, %c2_i32_31 : i32
    %c1_i32 = arith.constant 1 : i32
    %78 = arith.addi %77, %c1_i32 : i32
    %79 = arith.index_cast %78 : i32 to index
    %80 = memref.load %arg1[%79] : memref<2xi32, #tpu.memory_space<smem>>
    %81 = arith.sitofp %80 : i32 to f32
    %c0_i32_32 = arith.constant 0 : i32
    %82 = arith.cmpi sgt, %80, %c0_i32_32 : i32
    %cst_33 = arith.constant 1.000000e+00 : f32
    %83 = arith.divf %cst_33, %81 : f32
    %cst_34 = arith.constant 0.000000e+00 : f32
    %84 = arith.select %82, %83, %cst_34 : f32
    %c1 = arith.constant 1 : index
    %c0_35 = arith.constant 0 : index
    %c0_36 = arith.constant 0 : index
    %85 = vector.load %arg2[%c1, %c0_35, %c0_36] : memref<2x16x32xf32, #tpu.memory_space<vmem>>, vector<1x16x32xf32>
    %86 = vector.shape_cast %85 : vector<1x16x32xf32> to vector<16x32xf32>
    %c1_37 = arith.constant 1 : index
    %c0_38 = arith.constant 0 : index
    %c0_39 = arith.constant 0 : index
    %87 = vector.load %arg3[%c1_37, %c0_38, %c0_39] : memref<2x16x32xf32, #tpu.memory_space<vmem>>, vector<1x16x32xf32>
    %88 = vector.shape_cast %87 : vector<1x16x32xf32> to vector<16x32xf32>
    %c1_40 = arith.constant 1 : index
    %c0_41 = arith.constant 0 : index
    %c0_42 = arith.constant 0 : index
    %89 = vector.load %arg4[%c1_40, %c0_41, %c0_42] : memref<2x16x32xf32, #tpu.memory_space<vmem>>, vector<1x16x32xf32>
    %90 = vector.shape_cast %89 : vector<1x16x32xf32> to vector<16x32xf32>
    %91 = vector.broadcast %80 : i32 to vector<16x32xi32>
    %92 = arith.cmpi slt, %0, %91 : vector<16x32xi32>
    %93 = arith.subf %86, %90 : vector<16x32xf32>
    %94 = arith.subf %88, %90 : vector<16x32xf32>
    %95 = math.absf %93 : vector<16x32xf32>
    %96 = math.absf %94 : vector<16x32xf32>
    %97 = arith.addf %95, %96 : vector<16x32xf32>
    %cst_43 = arith.constant 0.000000e+00 : f32
    %98 = vector.broadcast %cst_43 : f32 to vector<16x32xf32>
    %99 = arith.select %92, %97, %98 : vector<16x32xi1>, vector<16x32xf32>
    %100 = vector.shape_cast %99 : vector<16x32xf32> to vector<1x16x32xf32>
    %cst_44 = arith.constant dense<0.000000e+00> : vector<1xf32>
    %101 = vector.multi_reduction <add>, %100, %cst_44 [1, 2] : vector<1x16x32xf32> to vector<1xf32>
    %102 = vector.shape_cast %101 : vector<1xf32> to vector<1x1x1xf32>
    %103 = vector.extract %102[0, 0, 0] : f32 from vector<1x1x1xf32>
    %104 = arith.mulf %103, %84 : f32
    %105 = arith.addf %34, %104 : f32
    %106 = arith.mulf %93, %93 : vector<16x32xf32>
    %107 = arith.mulf %94, %94 : vector<16x32xf32>
    %108 = arith.addf %106, %107 : vector<16x32xf32>
    %cst_45 = arith.constant 0.000000e+00 : f32
    %109 = vector.broadcast %cst_45 : f32 to vector<16x32xf32>
    %110 = arith.select %92, %108, %109 : vector<16x32xi1>, vector<16x32xf32>
    %111 = vector.shape_cast %110 : vector<16x32xf32> to vector<1x16x32xf32>
    %cst_46 = arith.constant dense<0.000000e+00> : vector<1xf32>
    %112 = vector.multi_reduction <add>, %111, %cst_46 [1, 2] : vector<1x16x32xf32> to vector<1xf32>
    %113 = vector.shape_cast %112 : vector<1xf32> to vector<1x1x1xf32>
    %114 = vector.extract %113[0, 0, 0] : f32 from vector<1x1x1xf32>
    %115 = arith.mulf %114, %84 : f32
    %116 = arith.addf %45, %115 : f32
    %117 = vector.extract_strided_slice %3 {offsets = [1, 0], sizes = [1, 16], strides = [1, 1]} : vector<2x16xf32> to vector<1x16xf32>
    %118 = vector.extract_strided_slice %5 {offsets = [1, 0], sizes = [1, 16], strides = [1, 1]} : vector<2x16xf32> to vector<1x16xf32>
    %119 = vector.broadcast %80 : i32 to vector<1x16xi32>
    %120 = arith.cmpi slt, %1, %119 : vector<1x16xi32>
    %cst_47 = arith.constant 0.000000e+00 : f32
    %121 = vector.broadcast %cst_47 : f32 to vector<1x16xf32>
    %122 = arith.subf %121, %117 : vector<1x16xf32>
    %cst_48 = arith.constant 0.000000e+00 : f32
    %123 = vector.broadcast %cst_48 : f32 to vector<1x16xf32>
    %124 = arith.maximumf %122, %123 : vector<1x16xf32>
    %125 = math.absf %117 : vector<1x16xf32>
    %cst_49 = arith.constant 0.000000e+00 : f32
    %126 = vector.broadcast %cst_49 : f32 to vector<1x16xf32>
    %127 = arith.subf %126, %125 : vector<1x16xf32>
    %128 = math.exp %127 : vector<1x16xf32>
    %129 = math.log1p %128 : vector<1x16xf32>
    %130 = arith.addf %124, %129 : vector<1x16xf32>
    %cst_50 = arith.constant 1.000000e+00 : f32
    %131 = vector.broadcast %cst_50 : f32 to vector<1x16xf32>
    %132 = arith.subf %131, %118 : vector<1x16xf32>
    %133 = arith.mulf %132, %117 : vector<1x16xf32>
    %cst_51 = arith.constant 1.900000e+01 : f32
    %134 = vector.broadcast %cst_51 : f32 to vector<1x16xf32>
    %135 = arith.mulf %134, %118 : vector<1x16xf32>
    %cst_52 = arith.constant 1.000000e+00 : f32
    %136 = vector.broadcast %cst_52 : f32 to vector<1x16xf32>
    %137 = arith.addf %136, %135 : vector<1x16xf32>
    %138 = arith.mulf %137, %130 : vector<1x16xf32>
    %139 = arith.addf %133, %138 : vector<1x16xf32>
    %cst_53 = arith.constant 0.000000e+00 : f32
    %140 = vector.broadcast %cst_53 : f32 to vector<1x16xf32>
    %141 = arith.select %120, %139, %140 : vector<1x16xi1>, vector<1x16xf32>
    %142 = vector.shape_cast %141 : vector<1x16xf32> to vector<1x1x16xf32>
    %cst_54 = arith.constant dense<0.000000e+00> : vector<1xf32>
    %143 = vector.multi_reduction <add>, %142, %cst_54 [1, 2] : vector<1x1x16xf32> to vector<1xf32>
    %144 = vector.shape_cast %143 : vector<1xf32> to vector<1x1x1xf32>
    %145 = vector.extract %144[0, 0, 0] : f32 from vector<1x1x1xf32>
    %146 = arith.mulf %145, %84 : f32
    %147 = arith.addf %76, %146 : f32
    %148 = vector.broadcast %105 : f32 to vector<8x128xf32>
    %c0_55 = arith.constant 0 : index
    %c0_56 = arith.constant 0 : index
    %c0_57 = arith.constant 0 : index
    %149 = vector.load %arg7[%c0_55, %c0_56, %c0_57] : memref<1x8x128xf32, #tpu.memory_space<vmem>>, vector<1x8x128xf32>
    %150 = vector.shape_cast %149 : vector<1x8x128xf32> to vector<8x128xf32>
    %151 = vector.shape_cast %148 : vector<8x128xf32> to vector<1x8x128xf32>
    tpu.vector_store %arg7[%c0_55, %c0_56, %c0_57], %151 {strides = array<i32>} : memref<1x8x128xf32, #tpu.memory_space<vmem>>, vector<1x8x128xf32>,
    %152 = vector.broadcast %116 : f32 to vector<8x128xf32>
    %c0_58 = arith.constant 0 : index
    %c0_59 = arith.constant 0 : index
    %c0_60 = arith.constant 0 : index
    %153 = vector.load %arg8[%c0_58, %c0_59, %c0_60] : memref<1x8x128xf32, #tpu.memory_space<vmem>>, vector<1x8x128xf32>
    %154 = vector.shape_cast %153 : vector<1x8x128xf32> to vector<8x128xf32>
    %155 = vector.shape_cast %152 : vector<8x128xf32> to vector<1x8x128xf32>
    tpu.vector_store %arg8[%c0_58, %c0_59, %c0_60], %155 {strides = array<i32>} : memref<1x8x128xf32, #tpu.memory_space<vmem>>, vector<1x8x128xf32>,
    %156 = vector.broadcast %147 : f32 to vector<8x128xf32>
    %c0_61 = arith.constant 0 : index
    %c0_62 = arith.constant 0 : index
    %c0_63 = arith.constant 0 : index
    %157 = vector.load %arg9[%c0_61, %c0_62, %c0_63] : memref<1x8x128xf32, #tpu.memory_space<vmem>>, vector<1x8x128xf32>
    %158 = vector.shape_cast %157 : vector<1x8x128xf32> to vector<8x128xf32>
    %159 = vector.shape_cast %156 : vector<8x128xf32> to vector<1x8x128xf32>
    tpu.vector_store %arg9[%c0_61, %c0_62, %c0_63], %159 {strides = array<i32>} : memref<1x8x128xf32, #tpu.memory_space<vmem>>, vector<1x8x128xf32>,
    return
  }
  func.func @transform_0(%arg0: i32, %arg1: memref<2xi32, #tpu.memory_space<smem>>) -> (i32, i32, i32) {
    %c0_i32 = arith.constant 0 : i32
    %c0_i32_0 = arith.constant 0 : i32
    %c0_i32_1 = arith.constant 0 : i32
    return %arg0, %c0_i32, %c0_i32_0 : i32, i32, i32
  }
  func.func @transform_1(%arg0: i32, %arg1: memref<2xi32, #tpu.memory_space<smem>>) -> (i32, i32, i32) {
    %c0_i32 = arith.constant 0 : i32
    %c0_i32_0 = arith.constant 0 : i32
    %c0_i32_1 = arith.constant 0 : i32
    return %arg0, %c0_i32, %c0_i32_0 : i32, i32, i32
  }
  func.func @transform_2(%arg0: i32, %arg1: memref<2xi32, #tpu.memory_space<smem>>) -> (i32, i32, i32) {
    %c0_i32 = arith.constant 0 : i32
    %c0_i32_0 = arith.constant 0 : i32
    %c0_i32_1 = arith.constant 0 : i32
    return %arg0, %c0_i32, %c0_i32_0 : i32, i32, i32
  }
  func.func @transform_3(%arg0: i32, %arg1: memref<2xi32, #tpu.memory_space<smem>>) -> (i32, i32, i32) {
    %c0_i32 = arith.constant 0 : i32
    %c0_i32_0 = arith.constant 0 : i32
    %c0_i32_1 = arith.constant 0 : i32
    return %arg0, %c0_i32, %c0_i32_0 : i32, i32, i32
  }
  func.func @transform_4(%arg0: i32, %arg1: memref<2xi32, #tpu.memory_space<smem>>) -> (i32, i32, i32) {
    %c0_i32 = arith.constant 0 : i32
    %c0_i32_0 = arith.constant 0 : i32
    %c0_i32_1 = arith.constant 0 : i32
    return %arg0, %c0_i32, %c0_i32_0 : i32, i32, i32
  }
  func.func @transform_5(%arg0: i32, %arg1: memref<2xi32, #tpu.memory_space<smem>>) -> (i32, i32, i32) {
    %c0_i32 = arith.constant 0 : i32
    %c0_i32_0 = arith.constant 0 : i32
    %c0_i32_1 = arith.constant 0 : i32
    return %arg0, %c0_i32, %c0_i32_0 : i32, i32, i32
  }
  func.func @transform_6(%arg0: i32, %arg1: memref<2xi32, #tpu.memory_space<smem>>) -> (i32, i32, i32) {
    %c0_i32 = arith.constant 0 : i32
    %c0_i32_0 = arith.constant 0 : i32
    %c0_i32_1 = arith.constant 0 : i32
    return %arg0, %c0_i32, %c0_i32_0 : i32, i32, i32
  }
  func.func @transform_7(%arg0: i32, %arg1: memref<2xi32, #tpu.memory_space<smem>>) -> (i32, i32, i32) {
    %c0_i32 = arith.constant 0 : i32
    %c0_i32_0 = arith.constant 0 : i32
    %c0_i32_1 = arith.constant 0 : i32
    return %arg0, %c0_i32, %c0_i32_0 : i32, i32, i32
  }
}

</mosaic_0001>

<llo_original>
// kernel: tpu_custom_call.1
$region0: #{tpu_custom_call.1}
  #allocation0 [shape = 'u32[]', space=smem, size = 0x4, offset = 0x4, fixed_abs, tag = 'smem constant byte address 0x4 - core index']
  #allocation1 [shape = 'u32[144,128]{1,0:T(1,128)}', space=vmem, size = 0x12000, scoped, tag = 'internal scratch']
  #allocation2 [shape = 's32[1]{0}', space=sflag, size = 0x4, scoped, tag = 'scoped memory for tpu_custom_call.1']
  #allocation3 [shape = 'u8[512]{0}', space=smem, size = 0x200, scoped, tag = 'prefetched SMEM operand 0']
  %s0 = inlined_call_operand.hbm [shape: s32[2], index: 0, kind: input, shape index: {}]
  %s1 = inlined_call_operand.hbm [shape: f32[2,16,32], index: 1, kind: input, shape index: {}]
  %s2 = inlined_call_operand.hbm [shape: f32[2,16,32], index: 2, kind: input, shape index: {}]
  %s3 = inlined_call_operand.hbm [shape: f32[2,16,32], index: 3, kind: input, shape index: {}]
  %s4 = inlined_call_operand.vmem [shape: f32[1,2,16], index: 4, kind: input, shape index: {}]
  %s5 = inlined_call_operand.vmem [shape: f32[1,2,16], index: 5, kind: input, shape index: {}]
  %s6 = inlined_call_operand.hbm [shape: f32[1,8,128], index: 6, kind: output, shape index: {0}]
  %s7 = inlined_call_operand.hbm [shape: f32[1,8,128], index: 7, kind: output, shape index: {1}]
  %s8 = inlined_call_operand.hbm [shape: f32[1,8,128], index: 8, kind: output, shape index: {2}]
  %9 = xla_tuple %s6, %s7, %s8
  %s10 = sld [smem:[#allocation0]]
  $region58: #{tpu_custom_call.1} parent=0
    _
  %s12 = ssub.s32 1, %s10
  %s13 = scalar_select 0, %s12, %s10
  %15 = dma.hbm_to_smem %s0, 16, [#allocation3], [#allocation2]
  %16 = dma.done [#allocation2], 16
  %17 = sfence
  $region1: #{tpu_custom_call.1} parent=0
    #allocation4 [shape = 'u8[16384]{0}', space=vmem, size = 0x4000, scoped, tag = 'input window, operand 1, single buffered']
    #allocation5 [shape = 's32[1]{0}', space=sflag, size = 0x4, scoped, tag = 'scoped memory for tpu_custom_call.1']
    #allocation6 [shape = 's32[1]{0}', space=sflag, size = 0x4, scoped, tag = 'scoped memory for tpu_custom_call.1']
    #allocation7 [shape = 'u8[16384]{0}', space=vmem, size = 0x4000, scoped, tag = 'input window, operand 2, single buffered']
    #allocation8 [shape = 's32[1]{0}', space=sflag, size = 0x4, scoped, tag = 'scoped memory for tpu_custom_call.1']
    #allocation9 [shape = 'u8[16384]{0}', space=vmem, size = 0x4000, scoped, tag = 'input window, operand 3, single buffered']
    #allocation10 [shape = 'u8[4096]{0}', space=vmem, size = 0x1000, scoped, tag = 'output window, operand 0, single buffered']
    #allocation11 [shape = 'u8[4096]{0}', space=vmem, size = 0x1000, scoped, tag = 'output window, operand 1, single buffered']
    #allocation12 [shape = 's32[1]{0}', space=sflag, size = 0x4, scoped, tag = 'scoped memory for tpu_custom_call.1']
    #allocation13 [shape = 'u8[4096]{0}', space=vmem, size = 0x1000, scoped, tag = 'output window, operand 2, single buffered']
    %18 = vsyncpa [#allocation5], 0
    %19 = vsyncpa [#allocation8], 0
    %20 = vsyncpa [#allocation6], 0
    %21 = vsyncpa [#allocation12], 0
    // Predicated region
    $region2: #{tpu_custom_call.1} parent=1 // pred_check
      _
    $region3: #{tpu_custom_call.1} parent=1 // pred_check_branch
      %23 = sbr.rel (0) target = $region5
    $region4: #{tpu_custom_call.1} parent=1 // pred_region
      %s25 = ssub.s32 512, 512
      %26 = vsyncadd [#allocation5], %s25
      %s27 = sshll.u32 [#allocation4], 4
      %s28 = int_to_ptr.vmem [resolvable:$true] %s27
      %33 = dma.hbm_to_vmem [thread:$0]  %s1, 512, %s28, [#allocation5], 128, 128, 8
    $region5: #{tpu_custom_call.1} parent=1 // pred_fallthru
      _
    // Predicated region
    $region6: #{tpu_custom_call.1} parent=1 // pred_check
      _
    $region7: #{tpu_custom_call.1} parent=1 // pred_check_branch
      %35 = sbr.rel (0) target = $region9
    $region8: #{tpu_custom_call.1} parent=1 // pred_region
      %s37 = ssub.s32 512, 512
      %38 = vsyncadd [#allocation8], %s37
      %s39 = sshll.u32 [#allocation7], 4
      %s40 = int_to_ptr.vmem [resolvable:$true] %s39
      %45 = dma.hbm_to_vmem [thread:$0]  %s2, 512, %s40, [#allocation8], 128, 128, 8
    $region9: #{tpu_custom_call.1} parent=1 // pred_fallthru
      _
    // Predicated region
    $region10: #{tpu_custom_call.1} parent=1 // pred_check
      _
    $region11: #{tpu_custom_call.1} parent=1 // pred_check_branch
      %47 = sbr.rel (0) target = $region13
    $region12: #{tpu_custom_call.1} parent=1 // pred_region
      %s49 = ssub.s32 512, 512
      %50 = vsyncadd [#allocation8], %s49
      %s51 = sshll.u32 [#allocation9], 4
      %s52 = int_to_ptr.vmem [resolvable:$true] %s51
      %57 = dma.hbm_to_vmem [thread:$0]  %s3, 512, %s52, [#allocation8], 128, 128, 8
    $region13: #{tpu_custom_call.1} parent=1 // pred_fallthru
      _
    // Predicated region
    $region14: #{tpu_custom_call.1} parent=1 // pred_check
      _
    $region15: #{tpu_custom_call.1} parent=1 // pred_check_branch
      %59 = sbr.rel (0) target = $region17
    $region16: #{tpu_custom_call.1} parent=1 // pred_region
      _
    $region17: #{tpu_custom_call.1} parent=1 // pred_fallthru
      _
    // Predicated region
    $region18: #{tpu_custom_call.1} parent=1 // pred_check
      _
    $region19: #{tpu_custom_call.1} parent=1 // pred_check_branch
      %61 = sbr.rel (0) target = $region21
    $region20: #{tpu_custom_call.1} parent=1 // pred_region
      _
    $region21: #{tpu_custom_call.1} parent=1 // pred_fallthru
      _
    // Predicated region
    $region22: #{tpu_custom_call.1} parent=1 // pred_check
      _
    $region23: #{tpu_custom_call.1} parent=1 // pred_check_branch
      %63 = sbr.rel (0) target = $region25
    $region24: #{tpu_custom_call.1} parent=1 // pred_region
      %64 = dma.done [#allocation5], 512
    $region25: #{tpu_custom_call.1} parent=1 // pred_fallthru
      _
    // Predicated region
    $region26: #{tpu_custom_call.1} parent=1 // pred_check
      _
    $region27: #{tpu_custom_call.1} parent=1 // pred_check_branch
      %66 = sbr.rel (0) target = $region29
    $region28: #{tpu_custom_call.1} parent=1 // pred_region
      %67 = dma.done [#allocation8], 512
    $region29: #{tpu_custom_call.1} parent=1 // pred_fallthru
      _
    // Predicated region
    $region30: #{tpu_custom_call.1} parent=1 // pred_check
      _
    $region31: #{tpu_custom_call.1} parent=1 // pred_check_branch
      %69 = sbr.rel (0) target = $region33
    $region32: #{tpu_custom_call.1} parent=1 // pred_region
      %70 = dma.done [#allocation8], 512
    $region33: #{tpu_custom_call.1} parent=1 // pred_fallthru
      _
    %v71 = vlaneseq
    %v72 = vshrl.u32 %v71, 7
    %v73 = vadd.s32 %v72, 8
    %v74 = vlaneseq
    %v75 = vand.u32 %v74, 127
    %v76 = vld [vmem:[%s4] sm:$0x3]
    %v77 = vld [vmem:[%s5] sm:$0x3]
    %s78 = smul.u32 0, 2
    %s79 = sld [smem:[#allocation3 + %s78]]
    %s80 = scvt.s32.f32 %s79
    %p81 = scmp.gt.s32.totalorder %s79, 0
    %v82 = vstv %s80
    %v83 = vrcp.pop %v82
    %s84 = vtos %v83
    %s85 = scalar_select %p81, %s84, 0.0
    %v86 = vld [vmem:[#allocation4] sm:$0xff]
    %v87 = vld [vmem:[#allocation4 + $0x8] sm:$0xff]
    %v88 = vld [vmem:[#allocation7] sm:$0xff]
    %v89 = vld [vmem:[#allocation7 + $0x8] sm:$0xff]
    %v90 = vld [vmem:[#allocation9] sm:$0xff]
    %v91 = vld [vmem:[#allocation9 + $0x8] sm:$0xff]
    %v92 = vstv %s79
    %vm93 = vcmp.lt.s32.totalorder %v72, %v92
    %vm94 = vcmp.lt.s32.totalorder %v73, %v92
    %v95 = vsub.f32 %v86, %v90
    %v96 = vsub.f32 %v87, %v91
    %v97 = vsub.f32 %v88, %v90
    %v98 = vsub.f32 %v89, %v91
    %v99 = vand.u32 2147483647, %v95
    %v100 = vand.u32 2147483647, %v96
    %v101 = vand.u32 2147483647, %v97
    %v102 = vand.u32 2147483647, %v98
    %v103 = vadd.f32 %v99, %v101
    %v104 = vadd.f32 %v100, %v102
    %v105 = vsel %vm93, %v103, 0.0
    %v106 = vsel %vm94, %v104, 0.0
    %vm107 = vcmask 261120
    %v108 = vsel %vm107, %v105, 0.0
    %v109 = vsel %vm107, %v106, 0.0
    %v110 = vadd.f32 %v108, %v109
    %111 = vadd.xlane.f32.xlu0 %v110
    %v112 = vpop.xlane.xlu0 %111
    %v113 = vrot.slane %v112, 4
    %v114 = vadd.f32 %v112, %v113
    %v115 = vrot.slane %v114, 2
    %v116 = vadd.f32 %v114, %v115
    %v117 = vrot.slane %v116, 1
    %v118 = vadd.f32 %v116, %v117
    %s119 = vtos %v118
    %s120 = smul.f32 %s119, %s85
    %s121 = sadd.f32 %s120, 0.0
    %v122 = vmul.f32 %v95, %v95
    %v123 = vmul.f32 %v96, %v96
    %v124 = vmul.f32 %v97, %v97
    %v125 = vmul.f32 %v98, %v98
    %v126 = vadd.f32 %v122, %v124
    %v127 = vadd.f32 %v123, %v125
    %v128 = vsel %vm93, %v126, 0.0
    %v129 = vsel %vm94, %v127, 0.0
    %v130 = vsel %vm107, %v128, 0.0
    %v131 = vsel %vm107, %v129, 0.0
    %v132 = vadd.f32 %v130, %v131
    %133 = vadd.xlane.f32.xlu0 %v132
    %v134 = vpop.xlane.xlu0 %133
    %v135 = vrot.slane %v134, 4
    %v136 = vadd.f32 %v134, %v135
    %v137 = vrot.slane %v136, 2
    %v138 = vadd.f32 %v136, %v137
    %v139 = vrot.slane %v138, 1
    %v140 = vadd.f32 %v138, %v139
    %s141 = vtos %v140
    %s142 = smul.f32 %s141, %s85
    %s143 = sadd.f32 %s142, 0.0
    %vm144 = vcmp.lt.s32.totalorder %v75, %v92
    %v145 = vsub.f32 0.0, %v76
    %v146 = vmax.f32 %v145, 0.0
    %v147 = vand.u32 2147483647, %v76
    %v148 = vsub.f32 0.0, %v147
    %v149 = vmul.f32 %v148, 1.442695
    %v150 = vpow.pop %v149
    %v151 = vadd.f32 %v150, 1.0
    %v152 = vlog2.pop %v151
    %v153 = vmul.f32 %v152, 0.6931472
    %v154 = vmul.f32 -0.5, %v150
    %v155 = vadd.f32 %v154, 1.0
    %v156 = vmul.f32 %v155, %v150
    %v157 = vand.u32 2147483647, %v150
    %vm158 = vcmp.lt.f32.partialorder %v157, 0.0004427343
    %v159 = vsel %vm158, %v156, %v153
    %v160 = vadd.f32 %v146, %v159
    %v161 = vsub.f32 1.0, %v77
    %v162 = vmul.f32 %v161, %v76
    %v163 = vmul.f32 %v77, 19.0
    %v164 = vadd.f32 %v163, 1.0
    %v165 = vmul.f32 %v164, %v160
    %v166 = vadd.f32 %v162, %v165
    %v167 = vsel %vm144, %v166, 0.0
    %vm168 = vcmask 122880
    %v169 = vsel %vm168, %v167, 0.0
    %170 = vadd.xlane.f32.xlu0 %v169
    %v171 = vpop.xlane.xlu0 %170
    %v172 = vrot.slane %v171, 4
    %v173 = vadd.f32 %v171, %v172
    %v174 = vrot.slane %v173, 2
    %v175 = vadd.f32 %v173, %v174
    %v176 = vrot.slane %v175, 1
    %v177 = vadd.f32 %v175, %v176
    %s178 = vtos %v177
    %s179 = smul.f32 %s178, %s85
    %s180 = sadd.f32 %s179, 0.0
    %s181 = sadd.s32 %s78, 1
    %s182 = sld [smem:[#allocation3 + %s181]]
    %s183 = scvt.s32.f32 %s182
    %p184 = scmp.gt.s32.totalorder %s182, 0
    %v185 = vstv %s183
    %v186 = vrcp.pop %v185
    %s187 = vtos %v186
    %s188 = scalar_select %p184, %s187, 0.0
    %s189 = scalar_lea.vmem [#allocation4], 16
    %v190 = vld [vmem:[%s189] sm:$0xff]
    %v191 = vld [vmem:[%s189 + $0x8] sm:$0xff]
    %s192 = scalar_lea.vmem [#allocation7], 16
    %v193 = vld [vmem:[%s192] sm:$0xff]
    %v194 = vld [vmem:[%s192 + $0x8] sm:$0xff]
    %s195 = scalar_lea.vmem [#allocation9], 16
    %v196 = vld [vmem:[%s195] sm:$0xff]
    %v197 = vld [vmem:[%s195 + $0x8] sm:$0xff]
    %v198 = vstv %s182
    %vm199 = vcmp.lt.s32.totalorder %v72, %v198
    %vm200 = vcmp.lt.s32.totalorder %v73, %v198
    %v201 = vsub.f32 %v190, %v196
    %v202 = vsub.f32 %v191, %v197
    %v203 = vsub.f32 %v193, %v196
    %v204 = vsub.f32 %v194, %v197
    %v205 = vand.u32 2147483647, %v201
    %v206 = vand.u32 2147483647, %v202
    %v207 = vand.u32 2147483647, %v203
    %v208 = vand.u32 2147483647, %v204
    %v209 = vadd.f32 %v205, %v207
    %v210 = vadd.f32 %v206, %v208
    %v211 = vsel %vm199, %v209, 0.0
    %v212 = vsel %vm200, %v210, 0.0
    %v213 = vsel %vm107, %v211, 0.0
    %v214 = vsel %vm107, %v212, 0.0
    %v215 = vadd.f32 %v213, %v214
    %216 = vadd.xlane.f32.xlu0 %v215
    %v217 = vpop.xlane.xlu0 %216
    %v218 = vrot.slane %v217, 4
    %v219 = vadd.f32 %v217, %v218
    %v220 = vrot.slane %v219, 2
    %v221 = vadd.f32 %v219, %v220
    %v222 = vrot.slane %v221, 1
    %v223 = vadd.f32 %v221, %v222
    %s224 = vtos %v223
    %s225 = smul.f32 %s224, %s188
    %s226 = sadd.f32 %s121, %s225
    %v227 = vmul.f32 %v201, %v201
    %v228 = vmul.f32 %v202, %v202
    %v229 = vmul.f32 %v203, %v203
    %v230 = vmul.f32 %v204, %v204
    %v231 = vadd.f32 %v227, %v229
    %v232 = vadd.f32 %v228, %v230
    %v233 = vsel %vm199, %v231, 0.0
    %v234 = vsel %vm200, %v232, 0.0
    %v235 = vsel %vm107, %v233, 0.0
    %v236 = vsel %vm107, %v234, 0.0
    %v237 = vadd.f32 %v235, %v236
    %238 = vadd.xlane.f32.xlu0 %v237
    %v239 = vpop.xlane.xlu0 %238
    %v240 = vrot.slane %v239, 4
    %v241 = vadd.f32 %v239, %v240
    %v242 = vrot.slane %v241, 2
    %v243 = vadd.f32 %v241, %v242
    %v244 = vrot.slane %v243, 1
    %v245 = vadd.f32 %v243, %v244
    %s246 = vtos %v245
    %s247 = smul.f32 %s246, %s188
    %s248 = sadd.f32 %s143, %s247
    %vm249 = vcmp.lt.s32.totalorder %v75, %v198
    %v250 = vsel %vm249, %v166, 0.0
    %v252 = vrot.slane %v250, 1
    %v254 = vsel %vm168, %v252, 0.0
    %255 = vadd.xlane.f32.xlu0 %v254
    %v256 = vpop.xlane.xlu0 %255
    %v257 = vrot.slane %v256, 4
    %v258 = vadd.f32 %v256, %v257
    %v259 = vrot.slane %v258, 2
    %v260 = vadd.f32 %v258, %v259
    %v261 = vrot.slane %v260, 1
    %v262 = vadd.f32 %v260, %v261
    %s263 = vtos %v262
    %s264 = smul.f32 %s263, %s188
    %s265 = sadd.f32 %s180, %s264
    %v266 = vstv %s226
    %267 = vst [vmem:[#allocation10] sm:$0xff] %v266
    %v268 = vstv %s248
    %269 = vst [vmem:[#allocation11] sm:$0xff] %v268
    %v270 = vstv %s265
    %271 = vst [vmem:[#allocation13] sm:$0xff] %v270
    // Predicated region
    $region34: #{tpu_custom_call.1} parent=1 // pred_check
      _
    $region35: #{tpu_custom_call.1} parent=1 // pred_check_branch
      %273 = sbr.rel (0) target = $region37
    $region36: #{tpu_custom_call.1} parent=1 // pred_region
      %s275 = ssub.s32 128, 128
      %276 = vsyncadd [#allocation6], %s275
      %s278 = sshll.u32 [#allocation10], 4
      %s279 = int_to_ptr.vmem [resolvable:$true] %s278
      %281 = dma.vmem_to_hbm [thread:$0]  %s279, 128, %s6, [#allocation6]
    $region37: #{tpu_custom_call.1} parent=1 // pred_fallthru
      _
    // Predicated region
    $region38: #{tpu_custom_call.1} parent=1 // pred_check
      _
    $region39: #{tpu_custom_call.1} parent=1 // pred_check_branch
      %283 = sbr.rel (0) target = $region41
    $region40: #{tpu_custom_call.1} parent=1 // pred_region
      %s285 = ssub.s32 128, 128
      %286 = vsyncadd [#allocation12], %s285
      %s288 = sshll.u32 [#allocation11], 4
      %s289 = int_to_ptr.vmem [resolvable:$true] %s288
      %291 = dma.vmem_to_hbm [thread:$0]  %s289, 128, %s7, [#allocation12]
    $region41: #{tpu_custom_call.1} parent=1 // pred_fallthru
      _
    // Predicated region
    $region42: #{tpu_custom_call.1} parent=1 // pred_check
      _
    $region43: #{tpu_custom_call.1} parent=1 // pred_check_branch
      %293 = sbr.rel (0) target = $region45
    $region44: #{tpu_custom_call.1} parent=1 // pred_region
      %s295 = ssub.s32 128, 128
      %296 = vsyncadd [#allocation12], %s295
      %s298 = sshll.u32 [#allocation13], 4
      %s299 = int_to_ptr.vmem [resolvable:$true] %s298
      %301 = dma.vmem_to_hbm [thread:$0]  %s299, 128, %s8, [#allocation12]
    $region45: #{tpu_custom_call.1} parent=1 // pred_fallthru
      _
    // Predicated region
    $region46: #{tpu_custom_call.1} parent=1 // pred_check
      _
    $region47: #{tpu_custom_call.1} parent=1 // pred_check_branch
      %303 = sbr.rel (0) target = $region49
    $region48: #{tpu_custom_call.1} parent=1 // pred_region
      %304 = dma.done [#allocation6], 128
    $region49: #{tpu_custom_call.1} parent=1 // pred_fallthru
      _
    // Predicated region
    $region50: #{tpu_custom_call.1} parent=1 // pred_check
      _
    $region51: #{tpu_custom_call.1} parent=1 // pred_check_branch
      %306 = sbr.rel (0) target = $region53
    $region52: #{tpu_custom_call.1} parent=1 // pred_region
      %307 = dma.done [#allocation12], 128
    $region53: #{tpu_custom_call.1} parent=1 // pred_fallthru
      _
    // Predicated region
    $region54: #{tpu_custom_call.1} parent=1 // pred_check
      _
    $region55: #{tpu_custom_call.1} parent=1 // pred_check_branch
      %309 = sbr.rel (0) target = $region57
    $region56: #{tpu_custom_call.1} parent=1 // pred_region
      %310 = dma.done [#allocation12], 128
    $region57: #{tpu_custom_call.1} parent=1 // pred_fallthru
      _
    %311 = vsyncpa [#allocation5], 1
    %312 = vsyncpa [#allocation8], 1
    %313 = vsyncpa [#allocation6], 1
    %314 = vsyncpa [#allocation12], 1

</llo_original>
